<compile_context>
chip_gen: v6e
topology: v6e:2x2x1
jax: 0.10.0
libtpu: 0.0.40
codegen_flags: <defaults>
</compile_context>

<pallas_src>
import functools

import jax
import jax.numpy as jnp
from jax.experimental import pallas as pl
from jax.experimental.pallas import tpu as pltpu

LANE = 128           # vreg lane width
SUB = 8              # vreg sublane count
NSTAT = 8            # number of accumulated statistics
BR_MAX = 2048        # max block rows -> 2048*128*4 B = 1 MiB per input block
NUM_SPLITS = 2       # column-range split (feeds both TCs on v7x)

EPS = 1e-07          # smp DiceLoss eps
SMOOTH = 0.0         # smp DiceLoss smooth


def _stats_kernel(x_ref, t_ref, a_ref, acc_ref, *, n_valid, tiles_per_core):
    """Accumulate the 8 dice/BCE statistics over one (block_rows, 128) tile.

    acc_ref is the resident output block (NSTAT, 8, 128): acc_ref[i] holds the
    lane/sublane-parallel partial sums of statistic i for this grid split.
    """
    c = pl.program_id(0)          # TensorCore split
    k = pl.program_id(1)          # column tile within this split

    @pl.when(k == 0)
    def _init():
        acc_ref[...] = jnp.zeros_like(acc_ref)

    br = x_ref.shape[0]
    tile = c * tiles_per_core + k                 # logical (unclamped) tile id

    # Element-level validity mask: covers the sub-128 tail, the partial last
    # row-block, and fully out-of-range logical tiles (their gidx >= n_valid).
    row = jax.lax.broadcasted_iota(jnp.int32, (br, LANE), 0)
    lane = jax.lax.broadcasted_iota(jnp.int32, (br, LANE), 1)
    gidx = (tile * br + row) * LANE + lane
    valid = gidx < n_valid

    neg = jnp.float32(-1e30)      # sigmoid/softplus underflow to exactly 0
    x = jnp.where(valid, x_ref[...].astype(jnp.float32), neg)
    t = jnp.where(valid, t_ref[...].astype(jnp.float32), jnp.float32(0.0))
    a = jnp.where(valid, a_ref[...].astype(jnp.float32), jnp.float32(0.0))

    sig = jax.nn.sigmoid(x)       # shared by both dice terms
    sp = jax.nn.softplus(x)       # BCEWithLogits(x, t) = softplus(x) - x*t

    stats = (sig, sp, t, a, sig * t, sig * a, x * t, x * a)
    for i, v in enumerate(stats):
        # (br,128) -> (br//8, 8, 128); sum over leading axis = pure vreg adds.
        acc_ref[i] += jnp.sum(v.reshape(br // SUB, SUB, LANE), axis=0)


def _compute_stats(logits, targets, aux_targets):
    """Returns the 8 global statistics as an (8,) f32 array."""
    num_valid = int(logits.size)
    flats = [logits.reshape(-1), targets.reshape(-1), aux_targets.reshape(-1)]

    # Pad only when required to form a (rows, 128) view (or when smaller than
    # one (8,128) tile).  Pad values are irrelevant: the kernel masks by index.
    l_pad = max(-(-num_valid // LANE) * LANE, SUB * LANE)
    if l_pad != num_valid:
        flats = [jnp.pad(f, (0, l_pad - num_valid)) for f in flats]

    nr = l_pad // LANE                              # rows of the (nr, 128) view
    br = min(BR_MAX, (nr // SUB) * SUB)             # block rows (mult. of 8, <= nr)
    nt = -(-nr // br)                               # total row tiles
    t_per = -(-nt // NUM_SPLITS)                    # tiles per split

    x2d, t2d, a2d = [f.reshape(nr, LANE) for f in flats]

    def in_map(c, k):
        # Clamp so the DMA stays in bounds; clamped (out-of-range logical)
        # tiles contribute nothing because their global indices are >= n_valid.
        return (jnp.minimum(c * t_per + k, nt - 1), 0)

    out = pl.pallas_call(
        functools.partial(_stats_kernel, n_valid=num_valid, tiles_per_core=t_per),
        out_shape=jax.ShapeDtypeStruct((NUM_SPLITS * NSTAT, SUB, LANE), jnp.float32),
        grid_spec=pltpu.PrefetchScalarGridSpec(
            num_scalar_prefetch=0,
            grid=(NUM_SPLITS, t_per),
            in_specs=[pl.BlockSpec((br, LANE), in_map)] * 3,
            out_specs=pl.BlockSpec((NSTAT, SUB, LANE), lambda c, k: (c, 0, 0)),
        ),
        compiler_params=pltpu.CompilerParams(
            dimension_semantics=("parallel", "arbitrary"),
            vmem_limit_bytes=32 * 1024 * 1024,
        ),
    )(x2d, t2d, a2d)

    # Tiny (2, 8, 8, 128) partial-sum slab -> 8 scalars (done once in XLA).
    return out.reshape(NUM_SPLITS, NSTAT, SUB, LANE).sum(axis=(0, 2, 3))


def dice_loss_mixup_v2(outputs, batch=None, *,
                       base_weight=0.5, aux_weight=0.5,
                       base_bce_weight=0.5, aux_bce_weight=0.5,
                       smooth=SMOOTH, eps=EPS):
    """Forward pass of DiceLossMixupV2 (binary mode, from_logits=True)."""
    # TODO(synk): only the binary DiceLoss mode with classes=None,
    # log_loss=False, ignore_index=None is implemented (module defaults).
    output, targets, aux_targets = outputs
    del batch  # unused by the module's forward

    s = _compute_stats(output, targets, aux_targets)
    sum_sig, sum_sp, sum_t, sum_a, inter_t, inter_a, xt, xa = [s[i] for i in range(NSTAT)]
    n_elems = jnp.float32(output.size)

    def dice_term(inter, tgt_sum):
        card = sum_sig + tgt_sum
        score = (2.0 * inter + smooth) / jnp.maximum(card + smooth, eps)
        loss = 1.0 - score
        return loss * (tgt_sum > 0).astype(loss.dtype)   # smp zeroes empty classes

    dice_loss = (base_weight * dice_term(inter_t, sum_t)
                 + aux_weight * dice_term(inter_a, sum_a))
    bce_t = (sum_sp - xt) / n_elems
    bce_a = (sum_sp - xa) / n_elems
    bce_loss = base_bce_weight * bce_t + aux_bce_weight * bce_a
    return dice_loss + bce_loss


def _reference(output, targets, aux_targets, *,
               base_weight=0.5, aux_weight=0.5,
               base_bce_weight=0.5, aux_bce_weight=0.5,
               smooth=SMOOTH, eps=EPS):
    """Pure-JAX reimplementation of the PyTorch module for verification."""
    x = output.astype(jnp.float32).reshape(-1)

    def dice(t):
        t = t.astype(jnp.float32).reshape(-1)
        p = jax.nn.sigmoid(x)
        inter = jnp.sum(p * t)
        card = jnp.sum(p + t)
        score = (2.0 * inter + smooth) / jnp.maximum(card + smooth, eps)
        loss = 1.0 - score
        return loss * (jnp.sum(t) > 0).astype(loss.dtype)

    def bce(t):
        t = t.astype(jnp.float32).reshape(-1)
        return jnp.mean(jax.nn.softplus(x) - x * t)

    dice_loss = base_weight * dice(targets) + aux_weight * dice(aux_targets)
    bce_loss = base_bce_weight * bce(targets) + aux_bce_weight * bce(aux_targets)
    return dice_loss + bce_loss


if __name__ == "__main__":
    key = jax.random.PRNGKey(0)
    k_out, k_t, k_o = jax.random.split(key, 3)

    # Small binary-segmentation shapes; L = 1152 exercises a partial last block
    # and the 2-way column split.
    N, C, H, W = 2, 1, 24, 24
    output = jax.random.normal(k_out, (N, C, H, W), jnp.float32)
    targets = jax.random.bernoulli(k_t, 0.3, (N, C, H, W)).astype(jnp.float32)
    other = jax.random.bernoulli(k_o, 0.3, (N, C, H, W)).astype(jnp.float32)
    lam = 0.7
    aux_targets = lam * targets + (1.0 - lam) * other   # mixup-style soft targets

    loss = dice_loss_mixup_v2((output, targets, aux_targets), batch=None)
    loss = jax.block_until_ready(loss)

    ref = jax.block_until_ready(_reference(output, targets, aux_targets))
    assert jnp.allclose(loss, ref, rtol=1e-5, atol=1e-5), (loss, ref)
    print("KERNEL_OK")
</pallas_src>

<mosaic_0001>
module attributes {stable_mosaic.version = 11 : i64} {
  func.func @_stats_kernel(%arg0: i32, %arg1: i32, %arg2: memref<8x128xf32, #tpu.memory_space<vmem>>, %arg3: memref<8x128xf32, #tpu.memory_space<vmem>>, %arg4: memref<8x128xf32, #tpu.memory_space<vmem>>, %arg5: memref<8x8x128xf32, #tpu.memory_space<vmem>>) attributes {dimension_semantics = [#tpu.dimension_semantics<parallel>, #tpu.dimension_semantics<arbitrary>], iteration_bounds = array<i64: 2, 1>, scalar_prefetch = 0 : i64, scratch_operands = 0 : i64, tpu.core_type = #tpu.core_type<tc>, window_params = [{transform_indices = @transform_0, window_bounds = array<i64: 8, 128>}, {transform_indices = @transform_1, window_bounds = array<i64: 8, 128>}, {transform_indices = @transform_2, window_bounds = array<i64: 8, 128>}, {transform_indices = @transform_3, window_bounds = array<i64: 8, 8, 128>}]} {
    %c0_i32 = arith.constant 0 : i32
    %0 = arith.cmpi eq, %arg1, %c0_i32 : i32
    %1 = arith.extui %0 : i1 to i32
    %c0_i32_0 = arith.constant 0 : i32
    %2 = arith.cmpi ne, %1, %c0_i32_0 : i32
    scf.if %2 {
      %cst_60 = arith.constant 0.000000e+00 : f32
      %111 = vector.broadcast %cst_60 : f32 to vector<8x8x128xf32>
      %c0_61 = arith.constant 0 : index
      %c0_62 = arith.constant 0 : index
      %c0_63 = arith.constant 0 : index
      %112 = vector.load %arg5[%c0_61, %c0_62, %c0_63] : memref<8x8x128xf32, #tpu.memory_space<vmem>>, vector<8x8x128xf32>
      tpu.vector_store %arg5[%c0_61, %c0_62, %c0_63], %111 {strides = array<i32>} : memref<8x8x128xf32, #tpu.memory_space<vmem>>, vector<8x8x128xf32>,
    } else {
    }
    %c1_i32 = arith.constant 1 : i32
    %3 = arith.muli %arg0, %c1_i32 : i32
    %4 = arith.addi %3, %arg1 : i32
    %5 = tpu.iota {dimensions = array<i32: 0>} : vector<8x128xi32>
    %6 = tpu.iota {dimensions = array<i32: 1>} : vector<8x128xi32>
    %c8_i32 = arith.constant 8 : i32
    %7 = arith.muli %4, %c8_i32 : i32
    %8 = vector.broadcast %7 : i32 to vector<8x128xi32>
    %9 = arith.addi %8, %5 : vector<8x128xi32>
    %c128_i32 = arith.constant 128 : i32
    %10 = vector.broadcast %c128_i32 : i32 to vector<8x128xi32>
    %11 = arith.muli %9, %10 : vector<8x128xi32>
    %12 = arith.addi %11, %6 : vector<8x128xi32>
    %c1152_i32 = arith.constant 1152 : i32
    %13 = vector.broadcast %c1152_i32 : i32 to vector<8x128xi32>
    %14 = arith.cmpi slt, %12, %13 : vector<8x128xi32>
    %c0 = arith.constant 0 : index
    %c0_1 = arith.constant 0 : index
    %15 = vector.load %arg2[%c0, %c0_1] : memref<8x128xf32, #tpu.memory_space<vmem>>, vector<8x128xf32>
    %cst = arith.constant -1.000000e+30 : f32
    %16 = vector.broadcast %cst : f32 to vector<8x128xf32>
    %17 = arith.select %14, %15, %16 : vector<8x128xi1>, vector<8x128xf32>
    %c0_2 = arith.constant 0 : index
    %c0_3 = arith.constant 0 : index
    %18 = vector.load %arg3[%c0_2, %c0_3] : memref<8x128xf32, #tpu.memory_space<vmem>>, vector<8x128xf32>
    %cst_4 = arith.constant 0.000000e+00 : f32
    %19 = vector.broadcast %cst_4 : f32 to vector<8x128xf32>
    %20 = arith.select %14, %18, %19 : vector<8x128xi1>, vector<8x128xf32>
    %c0_5 = arith.constant 0 : index
    %c0_6 = arith.constant 0 : index
    %21 = vector.load %arg4[%c0_5, %c0_6] : memref<8x128xf32, #tpu.memory_space<vmem>>, vector<8x128xf32>
    %cst_7 = arith.constant 0.000000e+00 : f32
    %22 = vector.broadcast %cst_7 : f32 to vector<8x128xf32>
    %23 = arith.select %14, %21, %22 : vector<8x128xi1>, vector<8x128xf32>
    %24 = arith.negf %17 : vector<8x128xf32>
    %25 = math.exp %24 : vector<8x128xf32>
    %cst_8 = arith.constant 1.000000e+00 : f32
    %26 = vector.broadcast %cst_8 : f32 to vector<8x128xf32>
    %27 = arith.addf %26, %25 : vector<8x128xf32>
    %28 = arith.divf %26, %27 : vector<8x128xf32>
    %cst_9 = arith.constant 0.000000e+00 : f32
    %29 = vector.broadcast %cst_9 : f32 to vector<8x128xf32>
    %30 = arith.maximumf %17, %29 : vector<8x128xf32>
    %31 = vector.broadcast %cst_9 : f32 to vector<8x128xf32>
    %32 = arith.subf %17, %31 : vector<8x128xf32>
    %33 = arith.cmpf one, %32, %32 : vector<8x128xf32>
    %34 = vector.broadcast %cst_9 : f32 to vector<8x128xf32>
    %35 = arith.addf %17, %34 : vector<8x128xf32>
    %36 = math.absf %32 : vector<8x128xf32>
    %cst_10 = arith.constant 0.000000e+00 : f32
    %37 = vector.broadcast %cst_10 : f32 to vector<8x128xf32>
    %38 = arith.subf %37, %36 : vector<8x128xf32>
    %39 = math.exp %38 : vector<8x128xf32>
    %40 = math.log1p %39 : vector<8x128xf32>
    %41 = arith.addf %30, %40 : vector<8x128xf32>
    %42 = arith.select %33, %35, %41 : vector<8x128xi1>, vector<8x128xf32>
    %43 = arith.mulf %28, %20 : vector<8x128xf32>
    %44 = arith.mulf %28, %23 : vector<8x128xf32>
    %45 = arith.mulf %17, %20 : vector<8x128xf32>
    %46 = arith.mulf %17, %23 : vector<8x128xf32>
    %c0_11 = arith.constant 0 : index
    %c0_12 = arith.constant 0 : index
    %c0_13 = arith.constant 0 : index
    %47 = vector.load %arg5[%c0_11, %c0_12, %c0_13] : memref<8x8x128xf32, #tpu.memory_space<vmem>>, vector<1x8x128xf32>
    %48 = vector.shape_cast %47 : vector<1x8x128xf32> to vector<8x128xf32>
    %49 = vector.shape_cast %28 : vector<8x128xf32> to vector<1x8x128xf32>
    %cst_14 = arith.constant dense<0.000000e+00> : vector<8x128xf32>
    %50 = vector.multi_reduction <add>, %49, %cst_14 [0] : vector<1x8x128xf32> to vector<8x128xf32>
    %51 = arith.addf %48, %50 : vector<8x128xf32>
    %c0_15 = arith.constant 0 : index
    %c0_16 = arith.constant 0 : index
    %c0_17 = arith.constant 0 : index
    %52 = vector.load %arg5[%c0_15, %c0_16, %c0_17] : memref<8x8x128xf32, #tpu.memory_space<vmem>>, vector<1x8x128xf32>
    %53 = vector.shape_cast %52 : vector<1x8x128xf32> to vector<8x128xf32>
    %54 = vector.shape_cast %51 : vector<8x128xf32> to vector<1x8x128xf32>
    tpu.vector_store %arg5[%c0_15, %c0_16, %c0_17], %54 {strides = array<i32>} : memref<8x8x128xf32, #tpu.memory_space<vmem>>, vector<1x8x128xf32>,
    %c1 = arith.constant 1 : index
    %c0_18 = arith.constant 0 : index
    %c0_19 = arith.constant 0 : index
    %55 = vector.load %arg5[%c1, %c0_18, %c0_19] : memref<8x8x128xf32, #tpu.memory_space<vmem>>, vector<1x8x128xf32>
    %56 = vector.shape_cast %55 : vector<1x8x128xf32> to vector<8x128xf32>
    %57 = vector.shape_cast %42 : vector<8x128xf32> to vector<1x8x128xf32>
    %cst_20 = arith.constant dense<0.000000e+00> : vector<8x128xf32>
    %58 = vector.multi_reduction <add>, %57, %cst_20 [0] : vector<1x8x128xf32> to vector<8x128xf32>
    %59 = arith.addf %56, %58 : vector<8x128xf32>
    %c1_21 = arith.constant 1 : index
    %c0_22 = arith.constant 0 : index
    %c0_23 = arith.constant 0 : index
    %60 = vector.load %arg5[%c1_21, %c0_22, %c0_23] : memref<8x8x128xf32, #tpu.memory_space<vmem>>, vector<1x8x128xf32>
    %61 = vector.shape_cast %60 : vector<1x8x128xf32> to vector<8x128xf32>
    %62 = vector.shape_cast %59 : vector<8x128xf32> to vector<1x8x128xf32>
    tpu.vector_store %arg5[%c1_21, %c0_22, %c0_23], %62 {strides = array<i32>} : memref<8x8x128xf32, #tpu.memory_space<vmem>>, vector<1x8x128xf32>,
    %c2 = arith.constant 2 : index
    %c0_24 = arith.constant 0 : index
    %c0_25 = arith.constant 0 : index
    %63 = vector.load %arg5[%c2, %c0_24, %c0_25] : memref<8x8x128xf32, #tpu.memory_space<vmem>>, vector<1x8x128xf32>
    %64 = vector.shape_cast %63 : vector<1x8x128xf32> to vector<8x128xf32>
    %65 = vector.shape_cast %20 : vector<8x128xf32> to vector<1x8x128xf32>
    %cst_26 = arith.constant dense<0.000000e+00> : vector<8x128xf32>
    %66 = vector.multi_reduction <add>, %65, %cst_26 [0] : vector<1x8x128xf32> to vector<8x128xf32>
    %67 = arith.addf %64, %66 : vector<8x128xf32>
    %c2_27 = arith.constant 2 : index
    %c0_28 = arith.constant 0 : index
    %c0_29 = arith.constant 0 : index
    %68 = vector.load %arg5[%c2_27, %c0_28, %c0_29] : memref<8x8x128xf32, #tpu.memory_space<vmem>>, vector<1x8x128xf32>
    %69 = vector.shape_cast %68 : vector<1x8x128xf32> to vector<8x128xf32>
    %70 = vector.shape_cast %67 : vector<8x128xf32> to vector<1x8x128xf32>
    tpu.vector_store %arg5[%c2_27, %c0_28, %c0_29], %70 {strides = array<i32>} : memref<8x8x128xf32, #tpu.memory_space<vmem>>, vector<1x8x128xf32>,
    %c3 = arith.constant 3 : index
    %c0_30 = arith.constant 0 : index
    %c0_31 = arith.constant 0 : index
    %71 = vector.load %arg5[%c3, %c0_30, %c0_31] : memref<8x8x128xf32, #tpu.memory_space<vmem>>, vector<1x8x128xf32>
    %72 = vector.shape_cast %71 : vector<1x8x128xf32> to vector<8x128xf32>
    %73 = vector.shape_cast %23 : vector<8x128xf32> to vector<1x8x128xf32>
    %cst_32 = arith.constant dense<0.000000e+00> : vector<8x128xf32>
    %74 = vector.multi_reduction <add>, %73, %cst_32 [0] : vector<1x8x128xf32> to vector<8x128xf32>
    %75 = arith.addf %72, %74 : vector<8x128xf32>
    %c3_33 = arith.constant 3 : index
    %c0_34 = arith.constant 0 : index
    %c0_35 = arith.constant 0 : index
    %76 = vector.load %arg5[%c3_33, %c0_34, %c0_35] : memref<8x8x128xf32, #tpu.memory_space<vmem>>, vector<1x8x128xf32>
    %77 = vector.shape_cast %76 : vector<1x8x128xf32> to vector<8x128xf32>
    %78 = vector.shape_cast %75 : vector<8x128xf32> to vector<1x8x128xf32>
    tpu.vector_store %arg5[%c3_33, %c0_34, %c0_35], %78 {strides = array<i32>} : memref<8x8x128xf32, #tpu.memory_space<vmem>>, vector<1x8x128xf32>,
    %c4 = arith.constant 4 : index
    %c0_36 = arith.constant 0 : index
    %c0_37 = arith.constant 0 : index
    %79 = vector.load %arg5[%c4, %c0_36, %c0_37] : memref<8x8x128xf32, #tpu.memory_space<vmem>>, vector<1x8x128xf32>
    %80 = vector.shape_cast %79 : vector<1x8x128xf32> to vector<8x128xf32>
    %81 = vector.shape_cast %43 : vector<8x128xf32> to vector<1x8x128xf32>
    %cst_38 = arith.constant dense<0.000000e+00> : vector<8x128xf32>
    %82 = vector.multi_reduction <add>, %81, %cst_38 [0] : vector<1x8x128xf32> to vector<8x128xf32>
    %83 = arith.addf %80, %82 : vector<8x128xf32>
    %c4_39 = arith.constant 4 : index
    %c0_40 = arith.constant 0 : index
    %c0_41 = arith.constant 0 : index
    %84 = vector.load %arg5[%c4_39, %c0_40, %c0_41] : memref<8x8x128xf32, #tpu.memory_space<vmem>>, vector<1x8x128xf32>
    %85 = vector.shape_cast %84 : vector<1x8x128xf32> to vector<8x128xf32>
    %86 = vector.shape_cast %83 : vector<8x128xf32> to vector<1x8x128xf32>
    tpu.vector_store %arg5[%c4_39, %c0_40, %c0_41], %86 {strides = array<i32>} : memref<8x8x128xf32, #tpu.memory_space<vmem>>, vector<1x8x128xf32>,
    %c5 = arith.constant 5 : index
    %c0_42 = arith.constant 0 : index
    %c0_43 = arith.constant 0 : index
    %87 = vector.load %arg5[%c5, %c0_42, %c0_43] : memref<8x8x128xf32, #tpu.memory_space<vmem>>, vector<1x8x128xf32>
    %88 = vector.shape_cast %87 : vector<1x8x128xf32> to vector<8x128xf32>
    %89 = vector.shape_cast %44 : vector<8x128xf32> to vector<1x8x128xf32>
    %cst_44 = arith.constant dense<0.000000e+00> : vector<8x128xf32>
    %90 = vector.multi_reduction <add>, %89, %cst_44 [0] : vector<1x8x128xf32> to vector<8x128xf32>
    %91 = arith.addf %88, %90 : vector<8x128xf32>
    %c5_45 = arith.constant 5 : index
    %c0_46 = arith.constant 0 : index
    %c0_47 = arith.constant 0 : index
    %92 = vector.load %arg5[%c5_45, %c0_46, %c0_47] : memref<8x8x128xf32, #tpu.memory_space<vmem>>, vector<1x8x128xf32>
    %93 = vector.shape_cast %92 : vector<1x8x128xf32> to vector<8x128xf32>
    %94 = vector.shape_cast %91 : vector<8x128xf32> to vector<1x8x128xf32>
    tpu.vector_store %arg5[%c5_45, %c0_46, %c0_47], %94 {strides = array<i32>} : memref<8x8x128xf32, #tpu.memory_space<vmem>>, vector<1x8x128xf32>,
    %c6 = arith.constant 6 : index
    %c0_48 = arith.constant 0 : index
    %c0_49 = arith.constant 0 : index
    %95 = vector.load %arg5[%c6, %c0_48, %c0_49] : memref<8x8x128xf32, #tpu.memory_space<vmem>>, vector<1x8x128xf32>
    %96 = vector.shape_cast %95 : vector<1x8x128xf32> to vector<8x128xf32>
    %97 = vector.shape_cast %45 : vector<8x128xf32> to vector<1x8x128xf32>
    %cst_50 = arith.constant dense<0.000000e+00> : vector<8x128xf32>
    %98 = vector.multi_reduction <add>, %97, %cst_50 [0] : vector<1x8x128xf32> to vector<8x128xf32>
    %99 = arith.addf %96, %98 : vector<8x128xf32>
    %c6_51 = arith.constant 6 : index
    %c0_52 = arith.constant 0 : index
    %c0_53 = arith.constant 0 : index
    %100 = vector.load %arg5[%c6_51, %c0_52, %c0_53] : memref<8x8x128xf32, #tpu.memory_space<vmem>>, vector<1x8x128xf32>
    %101 = vector.shape_cast %100 : vector<1x8x128xf32> to vector<8x128xf32>
    %102 = vector.shape_cast %99 : vector<8x128xf32> to vector<1x8x128xf32>
    tpu.vector_store %arg5[%c6_51, %c0_52, %c0_53], %102 {strides = array<i32>} : memref<8x8x128xf32, #tpu.memory_space<vmem>>, vector<1x8x128xf32>,
    %c7 = arith.constant 7 : index
    %c0_54 = arith.constant 0 : index
    %c0_55 = arith.constant 0 : index
    %103 = vector.load %arg5[%c7, %c0_54, %c0_55] : memref<8x8x128xf32, #tpu.memory_space<vmem>>, vector<1x8x128xf32>
    %104 = vector.shape_cast %103 : vector<1x8x128xf32> to vector<8x128xf32>
    %105 = vector.shape_cast %46 : vector<8x128xf32> to vector<1x8x128xf32>
    %cst_56 = arith.constant dense<0.000000e+00> : vector<8x128xf32>
    %106 = vector.multi_reduction <add>, %105, %cst_56 [0] : vector<1x8x128xf32> to vector<8x128xf32>
    %107 = arith.addf %104, %106 : vector<8x128xf32>
    %c7_57 = arith.constant 7 : index
    %c0_58 = arith.constant 0 : index
    %c0_59 = arith.constant 0 : index
    %108 = vector.load %arg5[%c7_57, %c0_58, %c0_59] : memref<8x8x128xf32, #tpu.memory_space<vmem>>, vector<1x8x128xf32>
    %109 = vector.shape_cast %108 : vector<1x8x128xf32> to vector<8x128xf32>
    %110 = vector.shape_cast %107 : vector<8x128xf32> to vector<1x8x128xf32>
    tpu.vector_store %arg5[%c7_57, %c0_58, %c0_59], %110 {strides = array<i32>} : memref<8x8x128xf32, #tpu.memory_space<vmem>>, vector<1x8x128xf32>,
    return
  }
  func.func @transform_0(%arg0: i32, %arg1: i32) -> (i32, i32) {
    %c1_i32 = arith.constant 1 : i32
    %0 = arith.muli %arg0, %c1_i32 : i32
    %1 = arith.addi %0, %arg1 : i32
    %c1_i32_0 = arith.constant 1 : i32
    %2 = arith.minsi %1, %c1_i32_0 : i32
    %c0_i32 = arith.constant 0 : i32
    %c0_i32_1 = arith.constant 0 : i32
    return %2, %c0_i32 : i32, i32
  }
  func.func @transform_1(%arg0: i32, %arg1: i32) -> (i32, i32) {
    %c1_i32 = arith.constant 1 : i32
    %0 = arith.muli %arg0, %c1_i32 : i32
    %1 = arith.addi %0, %arg1 : i32
    %c1_i32_0 = arith.constant 1 : i32
    %2 = arith.minsi %1, %c1_i32_0 : i32
    %c0_i32 = arith.constant 0 : i32
    %c0_i32_1 = arith.constant 0 : i32
    return %2, %c0_i32 : i32, i32
  }
  func.func @transform_2(%arg0: i32, %arg1: i32) -> (i32, i32) {
    %c1_i32 = arith.constant 1 : i32
    %0 = arith.muli %arg0, %c1_i32 : i32
    %1 = arith.addi %0, %arg1 : i32
    %c1_i32_0 = arith.constant 1 : i32
    %2 = arith.minsi %1, %c1_i32_0 : i32
    %c0_i32 = arith.constant 0 : i32
    %c0_i32_1 = arith.constant 0 : i32
    return %2, %c0_i32 : i32, i32
  }
  func.func @transform_3(%arg0: i32, %arg1: i32) -> (i32, i32, i32) {
    %c0_i32 = arith.constant 0 : i32
    %c0_i32_0 = arith.constant 0 : i32
    %c0_i32_1 = arith.constant 0 : i32
    return %arg0, %c0_i32, %c0_i32_0 : i32, i32, i32
  }
}

</mosaic_0001>

<llo_original>
// kernel: tpu_custom_call.1
$region0: #{tpu_custom_call.1}
  #allocation0 [shape = 'u32[]', space=smem, size = 0x4, offset = 0x4, fixed_abs, tag = 'smem constant byte address 0x4 - core index']
  #allocation1 [shape = 'u32[144,128]{1,0:T(1,128)}', space=vmem, size = 0x12000, scoped, tag = 'internal scratch']
  %s0 = inlined_call_operand.hbm [shape: f32[9,128], index: 0, kind: input, shape index: {}]
  %s1 = inlined_call_operand.hbm [shape: f32[9,128], index: 1, kind: input, shape index: {}]
  %s2 = inlined_call_operand.hbm [shape: f32[9,128], index: 2, kind: input, shape index: {}]
  %s3 = inlined_call_operand.hbm [shape: f32[16,8,128], index: 3, kind: output, shape index: {}]
  %s4 = sld [smem:[#allocation0]]
  $region61: #{tpu_custom_call.1} parent=0
    _
  %s6 = ssub.s32 1, %s4
  %s7 = scalar_select 0, %s6, %s4
  $region1: #{tpu_custom_call.1} parent=0
    #allocation2 [shape = 'u8[8192]{0}', space=vmem, size = 0x2000, scoped, tag = 'input window, operand 0']
    #allocation3 [shape = 's32[2]{0}', space=sflag, size = 0x8, scoped, tag = 'scoped memory for tpu_custom_call.1']
    #allocation4 [shape = 's32[2]{0}', space=sflag, size = 0x8, scoped, tag = 'scoped memory for tpu_custom_call.1']
    #allocation5 [shape = 'u8[8192]{0}', space=vmem, size = 0x2000, scoped, tag = 'input window, operand 1']
    #allocation6 [shape = 's32[2]{0}', space=sflag, size = 0x8, scoped, tag = 'scoped memory for tpu_custom_call.1']
    #allocation7 [shape = 'u8[8192]{0}', space=vmem, size = 0x2000, scoped, tag = 'input window, operand 2']
    #allocation8 [shape = 'u8[65536]{0}', space=vmem, size = 0x10000, scoped, tag = 'output window, operand 0']
    %8 = vsyncpa [#allocation3], 0
    %s9 = scalar_lea.sflag [#allocation3], 1
    %10 = vsyncpa %s9, 0
    %11 = vsyncpa [#allocation6], 0
    %s12 = scalar_lea.sflag [#allocation6], 1
    %13 = vsyncpa %s12, 0
    %14 = vsyncpa [#allocation4], 0
    %s15 = scalar_lea.sflag [#allocation4], 1
    %16 = vsyncpa %s15, 0
    loop: start=0, step=1, limit=4
    $region2: #{tpu_custom_call.1} parent=1 // loop_pre_header
      _
    $region3: #{tpu_custom_call.1} parent=1 // loop_header
      %s18 = sphi 0, %s22
      %p19 = scmp.ge.s32.totalorder %s18, 4
      %s25 = sphi 0, %s37
      %s26 = sphi 0, %s33
      %s27 = sphi 0, %s25
      %s28 = sphi 0, %s26
      %s29 = sphi 0, %s27
      %s30 = sphi 0, %s28
      %s46 = sphi 0, %s48
      %s49 = sphi 0, %s46
      %s50 = sphi 0, %s49
      %s66 = sphi 0, %s50
      %s78 = sphi 0, %s80
      %s81 = sphi 0, %s78
      %s82 = sphi 0, %s81
      %s98 = sphi 0, %s82
      %s110 = sphi 0, %s112
      %s113 = sphi 0, %s110
      %s114 = sphi 0, %s113
      %s130 = sphi 0, %s114
      %s136 = sphi 0, %s138
      %s139 = sphi 0, %s136
      %s140 = sphi 0, %s139
      %s156 = sphi 0, %s140
    $region4: #{tpu_custom_call.1} parent=1 // loop_header_branch
      %21 = sbr.rel (%p19) target = $region8
    $region5: #{tpu_custom_call.1} parent=1 // loop_body
      %s23 = ssub.s32 %s18, 1
      %s24 = ssub.s32 %s18, 2
      %s31 = sadd.s32 1, %s26
      %p32 = scmp.ge.s32.totalorder %s31, 1
      %s33 = scalar_select %p32, 0, %s31
      %s34 = sadd.s32 1, %s25
      %s35 = scalar_select %p32, %s34, %s25
      %p36 = scmp.ge.s32.totalorder %s35, 2
      %s37 = scalar_select %p36, 0, %s35
      %s38 = sadd.s32 %s25, %s26
      %p39 = scmp.lt.s32.totalorder %s38, 1
      %s40 = scalar_select %p39, %s38, 1
      %s41 = sadd.s32 %s37, %s33
      %p42 = scmp.lt.s32.totalorder %s41, 1
      %s43 = scalar_select %p42, %s41, 1
      %s44 = ssub.s32 %s40, %s43
      %p45 = scmp.eq.s32.totalorder %s44, 0
      %s47 = sadd.s32 %s46, 1
      %s48 = scalar_select %p45, %s46, %s47
      %p51 = pneg %p45
      %p52 = scmp.eq.s32.totalorder %s18, 1
      %p53 = por %p51, %p52
      %p54 = scmp.ne.s32.totalorder %s46, %s49
      %p55 = scmp.eq.s32.totalorder %s18, 0
      %p56 = por %p54, %p55
      %p57 = scmp.ne.s32.totalorder %s46, %s49
      %p58 = scmp.eq.s32.totalorder %s23, 1
      %p59 = por %p57, %p58
      %p60 = scmp.ne.s32.totalorder %s49, %s50
      %p61 = scmp.eq.s32.totalorder %s23, 0
      %p62 = por %p60, %p61
      %p63 = scmp.ne.s32.totalorder %s49, %s50
      %p64 = scmp.eq.s32.totalorder %s24, 1
      %p65 = por %p63, %p64
      %p67 = scmp.ne.s32.totalorder %s50, %s66
      %p68 = scmp.eq.s32.totalorder %s24, 0
      %p69 = por %p67, %p68
      %s70 = sadd.s32 %s25, %s26
      %p71 = scmp.lt.s32.totalorder %s70, 1
      %s72 = scalar_select %p71, %s70, 1
      %s73 = sadd.s32 %s37, %s33
      %p74 = scmp.lt.s32.totalorder %s73, 1
      %s75 = scalar_select %p74, %s73, 1
      %s76 = ssub.s32 %s72, %s75
      %p77 = scmp.eq.s32.totalorder %s76, 0
      %s79 = sadd.s32 %s78, 1
      %s80 = scalar_select %p77, %s78, %s79
      %p83 = pneg %p77
      %p84 = scmp.eq.s32.totalorder %s18, 1
      %p85 = por %p83, %p84
      %p86 = scmp.ne.s32.totalorder %s78, %s81
      %p87 = scmp.eq.s32.totalorder %s18, 0
      %p88 = por %p86, %p87
      %p89 = scmp.ne.s32.totalorder %s78, %s81
      %p90 = scmp.eq.s32.totalorder %s23, 1
      %p91 = por %p89, %p90
      %p92 = scmp.ne.s32.totalorder %s81, %s82
      %p93 = scmp.eq.s32.totalorder %s23, 0
      %p94 = por %p92, %p93
      %p95 = scmp.ne.s32.totalorder %s81, %s82
      %p96 = scmp.eq.s32.totalorder %s24, 1
      %p97 = por %p95, %p96
      %p99 = scmp.ne.s32.totalorder %s82, %s98
      %p100 = scmp.eq.s32.totalorder %s24, 0
      %p101 = por %p99, %p100
      %s102 = sadd.s32 %s25, %s26
      %p103 = scmp.lt.s32.totalorder %s102, 1
      %s104 = scalar_select %p103, %s102, 1
      %s105 = sadd.s32 %s37, %s33
      %p106 = scmp.lt.s32.totalorder %s105, 1
      %s107 = scalar_select %p106, %s105, 1
      %s108 = ssub.s32 %s104, %s107
      %p109 = scmp.eq.s32.totalorder %s108, 0
      %s111 = sadd.s32 %s110, 1
      %s112 = scalar_select %p109, %s110, %s111
      %p115 = pneg %p109
      %p116 = scmp.eq.s32.totalorder %s18, 1
      %p117 = por %p115, %p116
      %p118 = scmp.ne.s32.totalorder %s110, %s113
      %p119 = scmp.eq.s32.totalorder %s18, 0
      %p120 = por %p118, %p119
      %p121 = scmp.ne.s32.totalorder %s110, %s113
      %p122 = scmp.eq.s32.totalorder %s23, 1
      %p123 = por %p121, %p122
      %p124 = scmp.ne.s32.totalorder %s113, %s114
      %p125 = scmp.eq.s32.totalorder %s23, 0
      %p126 = por %p124, %p125
      %p127 = scmp.ne.s32.totalorder %s113, %s114
      %p128 = scmp.eq.s32.totalorder %s24, 1
      %p129 = por %p127, %p128
      %p131 = scmp.ne.s32.totalorder %s114, %s130
      %p132 = scmp.eq.s32.totalorder %s24, 0
      %p133 = por %p131, %p132
      %s134 = ssub.s32 %s25, %s37
      %p135 = scmp.eq.s32.totalorder %s134, 0
      %s137 = sadd.s32 %s136, 1
      %s138 = scalar_select %p135, %s136, %s137
      %p141 = pneg %p135
      %p142 = scmp.eq.s32.totalorder %s18, 1
      %p143 = por %p141, %p142
      %p144 = scmp.ne.s32.totalorder %s136, %s139
      %p145 = scmp.eq.s32.totalorder %s18, 0
      %p146 = por %p144, %p145
      %p147 = scmp.ne.s32.totalorder %s136, %s139
      %p148 = scmp.eq.s32.totalorder %s23, 1
      %p149 = por %p147, %p148
      %p150 = scmp.ne.s32.totalorder %s139, %s140
      %p151 = scmp.eq.s32.totalorder %s23, 0
      %p152 = por %p150, %p151
      %p153 = scmp.ne.s32.totalorder %s139, %s140
      %p154 = scmp.eq.s32.totalorder %s24, 1
      %p155 = por %p153, %p154
      %p157 = scmp.ne.s32.totalorder %s140, %s156
      %p158 = scmp.eq.s32.totalorder %s24, 0
      %p159 = por %p157, %p158
      %p160 = scmp.le.s32.totalorder 1, %s18
      %p161 = scmp.lt.s32.totalorder %s18, 3
      %p162 = pnand %p160, %p161
      %p163 = pneg %p162
      // Predicated region
      $region9: #{tpu_custom_call.1} parent=5 // pred_check
        _
      $region10: #{tpu_custom_call.1} parent=5 // pred_check_branch
        %165 = sbr.rel (%p162) target = $region12
      $region11: #{tpu_custom_call.1} parent=5 // pred_region
        %s166 = ssub.s32 %s18, 1
      $region12: #{tpu_custom_call.1} parent=5 // pred_fallthru
        _
      %p167 = scmp.lt.s32.totalorder %s18, 2
      // Predicated region
      $region13: #{tpu_custom_call.1} parent=5 // pred_check
        %p168 = pneg %p167
      $region14: #{tpu_custom_call.1} parent=5 // pred_check_branch
        %170 = sbr.rel (%p168) target = $region16
      $region15: #{tpu_custom_call.1} parent=5 // pred_region
        // Predicated region
        $region17: #{tpu_custom_call.1} parent=15 // pred_check
          %p171 = pneg %p56
        $region18: #{tpu_custom_call.1} parent=15 // pred_check_branch
          %173 = sbr.rel (%p171) target = $region20
        $region19: #{tpu_custom_call.1} parent=15 // pred_region
          %s174 = sand.u32 %s46, 1
          %s175 = scalar_lea.sflag [#allocation3], %s174
          %s176 = sand.u32 %s46, 1
          %s177 = smul.addr %s176, 8
          %s178 = scalar_lea.vmem [#allocation2], %s177
          %s179 = sadd.s32 %s25, %s26
          %p180 = scmp.lt.s32.totalorder %s179, 1
          %s181 = scalar_select %p180, %s179, 1
          %s183 = ssub.s32 128, 128
          %184 = vsyncadd %s175, %s183
          %s185 = smul.addr %s181, 128
          %s186 = scalar_lea.hbm %s0, %s185
          %s188 = sshll.u32 %s178, 4
          %s189 = int_to_ptr.vmem [resolvable:$true] %s188
          %191 = dma.hbm_to_vmem [thread:$0]  %s186, 128, %s189, %s175
        $region20: #{tpu_custom_call.1} parent=15 // pred_fallthru
          _
        // Predicated region
        $region21: #{tpu_custom_call.1} parent=15 // pred_check
          %p192 = pneg %p88
        $region22: #{tpu_custom_call.1} parent=15 // pred_check_branch
          %194 = sbr.rel (%p192) target = $region24
        $region23: #{tpu_custom_call.1} parent=15 // pred_region
          %s195 = sand.u32 %s18, 1
          %s196 = scalar_lea.sflag [#allocation6], %s195
          %s197 = sand.u32 %s78, 1
          %s198 = smul.addr %s197, 8
          %s199 = scalar_lea.vmem [#allocation5], %s198
          %s200 = sadd.s32 %s25, %s26
          %p201 = scmp.lt.s32.totalorder %s200, 1
          %s202 = scalar_select %p201, %s200, 1
          %s204 = ssub.s32 128, 128
          %205 = vsyncadd %s196, %s204
          %s206 = smul.addr %s202, 128
          %s207 = scalar_lea.hbm %s1, %s206
          %s209 = sshll.u32 %s199, 4
          %s210 = int_to_ptr.vmem [resolvable:$true] %s209
          %212 = dma.hbm_to_vmem [thread:$0]  %s207, 128, %s210, %s196
        $region24: #{tpu_custom_call.1} parent=15 // pred_fallthru
          _
        // Predicated region
        $region25: #{tpu_custom_call.1} parent=15 // pred_check
          %p213 = pneg %p120
        $region26: #{tpu_custom_call.1} parent=15 // pred_check_branch
          %215 = sbr.rel (%p213) target = $region28
        $region27: #{tpu_custom_call.1} parent=15 // pred_region
          %s216 = sand.u32 %s18, 1
          %s217 = scalar_lea.sflag [#allocation6], %s216
          %s218 = sand.u32 %s110, 1
          %s219 = smul.addr %s218, 8
          %s220 = scalar_lea.vmem [#allocation7], %s219
          %s221 = sadd.s32 %s25, %s26
          %p222 = scmp.lt.s32.totalorder %s221, 1
          %s223 = scalar_select %p222, %s221, 1
          %s225 = ssub.s32 128, 128
          %226 = vsyncadd %s217, %s225
          %s227 = smul.addr %s223, 128
          %s228 = scalar_lea.hbm %s2, %s227
          %s230 = sshll.u32 %s220, 4
          %s231 = int_to_ptr.vmem [resolvable:$true] %s230
          %233 = dma.hbm_to_vmem [thread:$0]  %s228, 128, %s231, %s217
        $region28: #{tpu_custom_call.1} parent=15 // pred_fallthru
          _
      $region16: #{tpu_custom_call.1} parent=5 // pred_fallthru
        _
      %p234 = scmp.le.s32.totalorder 1, %s18
      %p235 = scmp.lt.s32.totalorder %s18, 3
      %p236 = pnand %p234, %p235
      %p237 = pneg %p236
      // Predicated region
      $region29: #{tpu_custom_call.1} parent=5 // pred_check
        _
      $region30: #{tpu_custom_call.1} parent=5 // pred_check_branch
        %239 = sbr.rel (%p236) target = $region32
      $region31: #{tpu_custom_call.1} parent=5 // pred_region
        %s240 = ssub.s32 %s18, 1
        %s241 = sand.u32 %s49, 1
        %s242 = scalar_lea.sflag [#allocation3], %s241
        %s243 = sand.u32 %s49, 1
        %s244 = smul.addr %s243, 8
        %s245 = scalar_lea.vmem [#allocation2], %s244
        // Predicated region
        $region33: #{tpu_custom_call.1} parent=31 // pred_check
          %p246 = pneg %p62
        $region34: #{tpu_custom_call.1} parent=31 // pred_check_branch
          %248 = sbr.rel (%p246) target = $region36
        $region35: #{tpu_custom_call.1} parent=31 // pred_region
          %249 = dma.done %s242, 128
        $region36: #{tpu_custom_call.1} parent=31 // pred_fallthru
          _
        %s250 = sand.u32 %s23, 1
        %s251 = scalar_lea.sflag [#allocation6], %s250
        %s252 = sand.u32 %s81, 1
        %s253 = smul.addr %s252, 8
        %s254 = scalar_lea.vmem [#allocation5], %s253
        // Predicated region
        $region37: #{tpu_custom_call.1} parent=31 // pred_check
          %p255 = pneg %p94
        $region38: #{tpu_custom_call.1} parent=31 // pred_check_branch
          %257 = sbr.rel (%p255) target = $region40
        $region39: #{tpu_custom_call.1} parent=31 // pred_region
          %258 = dma.done %s251, 128
        $region40: #{tpu_custom_call.1} parent=31 // pred_fallthru
          _
        %s259 = sand.u32 %s23, 1
        %s260 = scalar_lea.sflag [#allocation6], %s259
        %s261 = sand.u32 %s113, 1
        %s262 = smul.addr %s261, 8
        %s263 = scalar_lea.vmem [#allocation7], %s262
        // Predicated region
        $region41: #{tpu_custom_call.1} parent=31 // pred_check
          %p264 = pneg %p126
        $region42: #{tpu_custom_call.1} parent=31 // pred_check_branch
          %266 = sbr.rel (%p264) target = $region44
        $region43: #{tpu_custom_call.1} parent=31 // pred_region
          %267 = dma.done %s260, 128
        $region44: #{tpu_custom_call.1} parent=31 // pred_fallthru
          _
        %s268 = sand.u32 %s49, 1
        %s269 = scalar_lea.sflag [#allocation3], %s268
        %s270 = sand.u32 %s49, 1
        %s271 = smul.addr %s270, 8
        %s272 = scalar_lea.vmem [#allocation2], %s271
        %p273 = pneg %p62
        %p274 = pneg %p59
        %s275 = sand.u32 %s23, 1
        %s276 = scalar_lea.sflag [#allocation6], %s275
        %s277 = sand.u32 %s81, 1
        %s278 = smul.addr %s277, 8
        %s279 = scalar_lea.vmem [#allocation5], %s278
        %p280 = pneg %p94
        %p281 = pneg %p91
        %s282 = sand.u32 %s23, 1
        %s283 = scalar_lea.sflag [#allocation6], %s282
        %s284 = sand.u32 %s113, 1
        %s285 = smul.addr %s284, 8
        %s286 = scalar_lea.vmem [#allocation7], %s285
        %p287 = pneg %p126
        %p288 = pneg %p123
        %p289 = pneg %p152
        %p290 = pneg %p149
        %s291 = sand.u32 %s139, 1
        %s292 = scalar_lea.sflag [#allocation4], %s291
        %s293 = sand.u32 %s139, 1
        %s294 = smul.addr %s293, 64
        %s295 = scalar_lea.vmem [#allocation8], %s294
        %s296 = sadd.s32 %s27, %s28
        %p297 = scmp.lt.s32.totalorder %s296, 1
        %s298 = scalar_select %p297, %s296, 1
        %s299 = sadd.s32 %s27, %s28
        %p300 = scmp.lt.s32.totalorder %s299, 1
        %s301 = scalar_select %p300, %s299, 1
        %s302 = sadd.s32 %s27, %s28
        %p303 = scmp.lt.s32.totalorder %s302, 1
        %s304 = scalar_select %p303, %s302, 1
        %s305 = smul.u32 8, %s27
        %p306 = scmp.eq.s32.totalorder %s28, 0
        // Predicated region
        $region45: #{tpu_custom_call.1} parent=31 // pred_check
          %p307 = pneg %p306
        $region46: #{tpu_custom_call.1} parent=31 // pred_check_branch
          %309 = sbr.rel (%p307) target = $region48
        $region47: #{tpu_custom_call.1} parent=31 // pred_region
          %310 = vst [vmem:[%s295] sm:$0xff] 0.0
          %311 = vst [vmem:[%s295 + $0x8] sm:$0xff] 0.0
          %312 = vst [vmem:[%s295 + $0x10] sm:$0xff] 0.0
          %313 = vst [vmem:[%s295 + $0x18] sm:$0xff] 0.0
          %314 = vst [vmem:[%s295 + $0x20] sm:$0xff] 0.0
          %315 = vst [vmem:[%s295 + $0x28] sm:$0xff] 0.0
          %316 = vst [vmem:[%s295 + $0x30] sm:$0xff] 0.0
          %317 = vst [vmem:[%s295 + $0x38] sm:$0xff] 0.0
        $region48: #{tpu_custom_call.1} parent=31 // pred_fallthru
          _
        %s318 = sadd.s32 %s27, %s28
        %v319 = vlaneseq
        %v320 = vshrl.u32 %v319, 7
        %v321 = vlaneseq
        %v322 = vand.u32 %v321, 127
        %s323 = smul.u32 %s318, 8
        %v324 = vstv %s323
        %v325 = vadd.s32 %v324, %v320
        %v326 = vmul.u32 %v325, 128
        %v327 = vadd.s32 %v326, %v322
        %vm328 = vcmp.lt.s32.totalorder %v327, 1152
        %v329 = vld [vmem:[%s245] sm:$0xff]
        %v330 = vsel %vm328, %v329, -1e+30
        %v331 = vld [vmem:[%s254] sm:$0xff]
        %v332 = vsel %vm328, %v331, 0.0
        %v333 = vld [vmem:[%s263] sm:$0xff]
        %v334 = vsel %vm328, %v333, 0.0
        %v335 = vxor.u32 %v330, 2147483648
        %v336 = vmul.f32 %v335, 1.442695
        %v337 = vpow.pop %v336
        %v338 = vadd.f32 %v337, 1.0
        %v339 = vrcp.pop %v338
        %v340 = vmul.f32 1.0, %v339
        %v341 = vmax.f32 %v330, 0.0
        %vm342 = vcmp.ne.f32.partialorder %v330, %v330
        %v343 = vadd.f32 %v330, 0.0
        %v344 = vand.u32 2147483647, %v330
        %v345 = vsub.f32 0.0, %v344
        %v346 = vmul.f32 %v345, 1.442695
        %v347 = vpow.pop %v346
        %v348 = vadd.f32 %v347, 1.0
        %v349 = vlog2.pop %v348
        %v350 = vmul.f32 %v349, 0.6931472
        %v351 = vmul.f32 -0.5, %v347
        %v352 = vadd.f32 %v351, 1.0
        %v353 = vmul.f32 %v352, %v347
        %v354 = vand.u32 2147483647, %v347
        %vm355 = vcmp.lt.f32.partialorder %v354, 0.0004427343
        %v356 = vsel %vm355, %v353, %v350
        %v357 = vadd.f32 %v341, %v356
        %v358 = vsel %vm342, %v343, %v357
        %v359 = vmul.f32 %v340, %v332
        %v360 = vmul.f32 %v340, %v334
        %v361 = vmul.f32 %v330, %v332
        %v362 = vmul.f32 %v330, %v334
        %v363 = vld [vmem:[%s295] sm:$0xff]
        %v364 = vadd.f32 %v340, 0.0
        %v365 = vadd.f32 %v363, %v364
        %366 = vst [vmem:[%s295] sm:$0xff] %v365
        %s367 = scalar_lea.vmem %s295, 8 [#allocation8]
        %v368 = vld [vmem:[%s367] sm:$0xff]
        %v369 = vadd.f32 %v358, 0.0
        %v370 = vadd.f32 %v368, %v369
        %371 = vst [vmem:[%s367] sm:$0xff] %v370
        %s372 = scalar_lea.vmem %s295, 16 [#allocation8]
        %v373 = vld [vmem:[%s372] sm:$0xff]
        %v374 = vadd.f32 %v332, 0.0
        %v375 = vadd.f32 %v373, %v374
        %376 = vst [vmem:[%s372] sm:$0xff] %v375
        %s377 = scalar_lea.vmem %s295, 24 [#allocation8]
        %v378 = vld [vmem:[%s377] sm:$0xff]
        %v379 = vadd.f32 %v334, 0.0
        %v380 = vadd.f32 %v378, %v379
        %381 = vst [vmem:[%s377] sm:$0xff] %v380
        %s382 = scalar_lea.vmem %s295, 32 [#allocation8]
        %v383 = vld [vmem:[%s382] sm:$0xff]
        %v384 = vadd.f32 %v359, 0.0
        %v385 = vadd.f32 %v383, %v384
        %386 = vst [vmem:[%s382] sm:$0xff] %v385
        %s387 = scalar_lea.vmem %s295, 40 [#allocation8]
        %v388 = vld [vmem:[%s387] sm:$0xff]
        %v389 = vadd.f32 %v360, 0.0
        %v390 = vadd.f32 %v388, %v389
        %391 = vst [vmem:[%s387] sm:$0xff] %v390
        %s392 = scalar_lea.vmem %s295, 48 [#allocation8]
        %v393 = vld [vmem:[%s392] sm:$0xff]
        %v394 = vadd.f32 %v361, 0.0
        %v395 = vadd.f32 %v393, %v394
        %396 = vst [vmem:[%s392] sm:$0xff] %v395
        %s397 = scalar_lea.vmem %s295, 56 [#allocation8]
        %v398 = vld [vmem:[%s397] sm:$0xff]
        %v399 = vadd.f32 %v362, 0.0
        %v400 = vadd.f32 %v398, %v399
        %401 = vst [vmem:[%s397] sm:$0xff] %v400
        %s402 = sand.u32 %s139, 1
        %s403 = scalar_lea.sflag [#allocation4], %s402
        %s404 = sand.u32 %s139, 1
        %s405 = smul.addr %s404, 64
        %s406 = scalar_lea.vmem [#allocation8], %s405
        // Predicated region
        $region49: #{tpu_custom_call.1} parent=31 // pred_check
          %p407 = pneg %p149
        $region50: #{tpu_custom_call.1} parent=31 // pred_check_branch
          %409 = sbr.rel (%p407) target = $region52
        $region51: #{tpu_custom_call.1} parent=31 // pred_region
          %s410 = smul.u32 8, %s27
          %s412 = ssub.s32 1024, 1024
          %413 = vsyncadd %s403, %s412
          %s414 = smul.addr %s410, 128
          %s415 = scalar_lea.hbm %s3, %s414
          %s416 = sshll.u32 %s406, 4
          %s417 = int_to_ptr.vmem [resolvable:$true] %s416
          %422 = dma.vmem_to_hbm [thread:$0]  %s417, 1024, %s415, %s403, 128, 128, 8
        $region52: #{tpu_custom_call.1} parent=31 // pred_fallthru
          _
      $region32: #{tpu_custom_call.1} parent=5 // pred_fallthru
        _
      %p423 = scmp.le.s32.totalorder 2, %s18
      // Predicated region
      $region53: #{tpu_custom_call.1} parent=5 // pred_check
        %p424 = pneg %p423
      $region54: #{tpu_custom_call.1} parent=5 // pred_check_branch
        %426 = sbr.rel (%p424) target = $region56
      $region55: #{tpu_custom_call.1} parent=5 // pred_region
        %s427 = ssub.s32 %s18, 2
        // Predicated region
        $region57: #{tpu_custom_call.1} parent=55 // pred_check
          %p428 = pneg %p155
        $region58: #{tpu_custom_call.1} parent=55 // pred_check_branch
          %430 = sbr.rel (%p428) target = $region60
        $region59: #{tpu_custom_call.1} parent=55 // pred_region
          %s431 = sand.u32 %s140, 1
          %s432 = scalar_lea.sflag [#allocation4], %s431
          %s433 = sand.u32 %s140, 1
          %s434 = smul.addr %s433, 64
          %s435 = scalar_lea.vmem [#allocation8], %s434
          %436 = dma.done %s432, 1024
        $region60: #{tpu_custom_call.1} parent=55 // pred_fallthru
          _
      $region56: #{tpu_custom_call.1} parent=5 // pred_fallthru
        _
    $region6: #{tpu_custom_call.1} parent=1 // loop_footer
      %s22 = sadd.s32 1, %s18
    $region7: #{tpu_custom_call.1} parent=1 // loop_footer_branch
      %17 = sbr.rel target = $region3
    $region8: #{tpu_custom_call.1} parent=1 // loop_exit
      _
    %437 = vsyncpa [#allocation3], 1
    %s438 = scalar_lea.sflag [#allocation3], 1
    %439 = vsyncpa %s438, 1
    %440 = vsyncpa [#allocation6], 1
    %s441 = scalar_lea.sflag [#allocation6], 1
    %442 = vsyncpa %s441, 1
    %443 = vsyncpa [#allocation4], 1
    %s444 = scalar_lea.sflag [#allocation4], 1
    %445 = vsyncpa %s444, 1

</llo_original>
